<compile_context>
chip_gen: v7x
topology: tpu7x:2x2x1
jax: 0.10.0
libtpu: 0.0.40
codegen_flags: <defaults>
</compile_context>

<pallas_src>
import functools

import jax
import jax.numpy as jnp
from jax.experimental import pallas as pl
from jax.experimental.pallas import tpu as pltpu


def _round_up(x, m):
    return (x + m - 1) // m * m


def _head_kernel(cls_ref, patches_ref, w_cls_ref, w_avg_ref, b_ref, out_ref,
                 sum_ref, *, inv_num_patches, inv_two_d):
    """Grid = (batch tile i, patch tile j); j is the reduction axis."""
    j = pl.program_id(1)

    @pl.when(j == 0)
    def _init():
        sum_ref[...] = jnp.zeros_like(sum_ref)

    # Per-tile patch accumulation: only this tile is upcast; running sum in f32.
    sum_ref[...] += jnp.sum(patches_ref[...], axis=1, dtype=jnp.float32)

    @pl.when(j == pl.num_programs(1) - 1)
    def _finalize():
        cls = cls_ref[...].astype(jnp.float32)        # (Bt, D)
        avg = sum_ref[...] * inv_num_patches          # (Bt, D)

        # LayerNorm over the *virtual* concat [cls ; avg] without concatenating:
        # combine sums / sums-of-squares of the two halves.
        mu = (jnp.sum(cls, axis=-1, keepdims=True)
              + jnp.sum(avg, axis=-1, keepdims=True)) * inv_two_d
        cls_c = cls - mu
        avg_c = avg - mu
        var = (jnp.sum(cls_c * cls_c, axis=-1, keepdims=True)
               + jnp.sum(avg_c * avg_c, axis=-1, keepdims=True)) * inv_two_d
        inv_std = jax.lax.rsqrt(var + 1e-5)

        # Split linear: [cls_n ; avg_n] @ W == cls_n @ W[:D] + avg_n @ W[D:]
        logits = (
            jnp.dot(cls_c * inv_std, w_cls_ref[...].astype(jnp.float32),
                    preferred_element_type=jnp.float32)
            + jnp.dot(avg_c * inv_std, w_avg_ref[...].astype(jnp.float32),
                      preferred_element_type=jnp.float32)
            + b_ref[...].astype(jnp.float32)
        )
        out_ref[...] = logits.astype(out_ref.dtype)


def model_head(cls_token, patch_tokens, weight, bias, *, bt=None, nt=None):
    """cls_token: [B, D], patch_tokens: [B, N, D], weight: [2D, C], bias: [1, C]."""
    B, D = cls_token.shape
    _, N, _ = patch_tokens.shape
    C = weight.shape[1]
    assert weight.shape[0] == 2 * D

    # ---- tile / padding choices ((8,128)-friendly, lane-dense output) ----
    Bt = bt if bt is not None else min(_round_up(B, 8), 64)
    Bt = _round_up(Bt, 8)
    B_pad = _round_up(B, Bt)

    if nt is None:
        itemsize = jnp.dtype(patch_tokens.dtype).itemsize
        # ~8 MiB per pipeline buffer: double-buffered stream + resident weights
        # stay well inside scoped VMEM on v5e/v6e/v7x (limit raised below).
        budget = 8 * 1024 * 1024
        nt = max(8, budget // max(1, Bt * D * itemsize))
    Nt = max(8, (min(int(nt), _round_up(N, 8)) // 8) * 8)
    N_pad = _round_up(N, Nt)

    C_pad = _round_up(C, 128)

    # ---- zero-pad operands (exact: mean divides by the true N) ----
    cls_p = jnp.pad(cls_token, ((0, B_pad - B), (0, 0)))
    patch_p = jnp.pad(patch_tokens, ((0, B_pad - B), (0, N_pad - N), (0, 0)))
    w_p = jnp.pad(weight, ((0, 0), (0, C_pad - C)))
    w_cls = w_p[:D, :]
    w_avg = w_p[D:, :]
    b_p = jnp.pad(bias, ((0, 0), (0, C_pad - C)))

    grid = (B_pad // Bt, N_pad // Nt)

    # VMEM estimate -> explicit limit (double-buffered inputs + resident params).
    p_item = jnp.dtype(patch_p.dtype).itemsize
    vmem_bytes = (
        2 * Bt * Nt * D * p_item                               # patch stream (x2 buf)
        + 2 * Bt * D * jnp.dtype(cls_p.dtype).itemsize         # cls tile
        + 2 * 2 * D * C_pad * jnp.dtype(w_p.dtype).itemsize    # weight halves
        + 2 * C_pad * jnp.dtype(b_p.dtype).itemsize            # bias
        + 2 * Bt * C_pad * 4                                   # output tile
        + Bt * D * 4                                           # f32 accumulator
    )
    vmem_limit = int(min(max(2 * vmem_bytes, 32 * 1024 * 1024), 64 * 1024 * 1024))

    kernel = functools.partial(
        _head_kernel,
        inv_num_patches=1.0 / float(N),
        inv_two_d=1.0 / float(2 * D),
    )

    out = pl.pallas_call(
        kernel,
        out_shape=jax.ShapeDtypeStruct((B_pad, C_pad), jnp.float32),
        grid_spec=pltpu.PrefetchScalarGridSpec(
            num_scalar_prefetch=0,
            grid=grid,
            in_specs=[
                pl.BlockSpec((Bt, D), lambda i, j: (i, 0)),          # cls (per-batch)
                pl.BlockSpec((Bt, Nt, D), lambda i, j: (i, j, 0)),   # streamed patches
                pl.BlockSpec((D, C_pad), lambda i, j: (0, 0)),       # W[:D]  (resident)
                pl.BlockSpec((D, C_pad), lambda i, j: (0, 0)),       # W[D:]  (resident)
                pl.BlockSpec((1, C_pad), lambda i, j: (0, 0)),       # bias   (resident)
            ],
            out_specs=pl.BlockSpec((Bt, C_pad), lambda i, j: (i, 0)),
            scratch_shapes=[pltpu.VMEM((Bt, D), jnp.float32)],
        ),
        compiler_params=pltpu.CompilerParams(
            dimension_semantics=("parallel", "arbitrary"),
            vmem_limit_bytes=vmem_limit,
        ),
    )(cls_p, patch_p, w_cls, w_avg, b_p)

    return out[:B, :C]


def _reference_head(cls_token, patch_tokens, weight, bias):
    avg = jnp.mean(patch_tokens.astype(jnp.float32), axis=1)
    concat = jnp.concatenate([cls_token.astype(jnp.float32), avg], axis=1)
    mu = jnp.mean(concat, axis=-1, keepdims=True)
    var = jnp.mean((concat - mu) ** 2, axis=-1, keepdims=True)
    normed = (concat - mu) * jax.lax.rsqrt(var + 1e-5)
    return normed @ weight.astype(jnp.float32) + bias.astype(jnp.float32)


if __name__ == "__main__":
    # --- test 1: small shapes, single grid step ---
    B, D, N, C = 2, 32, 8, 10
    key = jax.random.PRNGKey(0)
    k_cls, k_patch, k_w, k_b = jax.random.split(key, 4)
    cls_token = jax.random.normal(k_cls, (B, D), dtype=jnp.float32)
    patch_tokens = jax.random.normal(k_patch, (B, N, D), dtype=jnp.float32)
    bound = 1.0 / (2 * D) ** 0.5
    weight = jax.random.uniform(k_w, (2 * D, C), minval=-bound, maxval=bound,
                                dtype=jnp.float32)
    bias = jax.random.uniform(k_b, (1, C), minval=-bound, maxval=bound,
                              dtype=jnp.float32)

    out = jax.block_until_ready(model_head(cls_token, patch_tokens, weight, bias))
    ref = _reference_head(cls_token, patch_tokens, weight, bias)
    assert out.shape == (B, C)
    assert jnp.allclose(out, ref, atol=1e-4, rtol=1e-4)

    # --- test 2: ragged B/N + bf16 patch stream, multi-step grid reduction ---
    B2, D2, N2, C2 = 5, 128, 21, 10
    k1, k2, k3, k4 = jax.random.split(jax.random.PRNGKey(1), 4)
    cls2 = jax.random.normal(k1, (B2, D2), dtype=jnp.float32)
    patch2 = jax.random.normal(k2, (B2, N2, D2), dtype=jnp.float32).astype(jnp.bfloat16)
    bound2 = 1.0 / (2 * D2) ** 0.5
    w2 = jax.random.uniform(k3, (2 * D2, C2), minval=-bound2, maxval=bound2,
                            dtype=jnp.float32)
    b2 = jax.random.uniform(k4, (1, C2), minval=-bound2, maxval=bound2,
                            dtype=jnp.float32)
    out2 = jax.block_until_ready(model_head(cls2, patch2, w2, b2, nt=8))
    ref2 = _reference_head(cls2, patch2, w2, b2)
    assert out2.shape == (B2, C2)
    assert jnp.allclose(out2, ref2, atol=2e-2, rtol=2e-2)

    print("KERNEL_OK")
</pallas_src>

<mosaic_0001>
module attributes {stable_mosaic.version = 11 : i64} {
  func.func @_head_kernel(%arg0: i32, %arg1: i32, %arg2: memref<8x32xf32, #tpu.memory_space<vmem>>, %arg3: memref<8x8x32xf32, #tpu.memory_space<vmem>>, %arg4: memref<32x128xf32, #tpu.memory_space<vmem>>, %arg5: memref<32x128xf32, #tpu.memory_space<vmem>>, %arg6: memref<1x128xf32, #tpu.memory_space<vmem>>, %arg7: memref<8x128xf32, #tpu.memory_space<vmem>>, %arg8: memref<8x32xf32, #tpu.memory_space<vmem>>) attributes {dimension_semantics = [#tpu.dimension_semantics<parallel>, #tpu.dimension_semantics<arbitrary>], iteration_bounds = array<i64: 1, 1>, scalar_prefetch = 0 : i64, scratch_operands = 1 : i64, tpu.core_type = #tpu.core_type<tc>, window_params = [{transform_indices = @transform_0, window_bounds = array<i64: 8, 32>}, {transform_indices = @transform_1, window_bounds = array<i64: 8, 8, 32>}, {pipeline_mode = #tpu.pipeline_mode<synchronous>, transform_indices = @transform_2, window_bounds = array<i64: 32, 128>}, {pipeline_mode = #tpu.pipeline_mode<synchronous>, transform_indices = @transform_3, window_bounds = array<i64: 32, 128>}, {pipeline_mode = #tpu.pipeline_mode<synchronous>, transform_indices = @transform_4, window_bounds = array<i64: 1, 128>}, {transform_indices = @transform_5, window_bounds = array<i64: 8, 128>}]} {
    %c0_i32 = arith.constant 0 : i32
    %0 = arith.cmpi eq, %arg1, %c0_i32 : i32
    %1 = arith.extui %0 : i1 to i32
    %c0_i32_0 = arith.constant 0 : i32
    %2 = arith.cmpi ne, %1, %c0_i32_0 : i32
    scf.if %2 {
      %cst_9 = arith.constant 0.000000e+00 : f32
      %11 = vector.broadcast %cst_9 : f32 to vector<8x32xf32>
      %c0_10 = arith.constant 0 : index
      %c0_11 = arith.constant 0 : index
      %12 = vector.load %arg8[%c0_10, %c0_11] : memref<8x32xf32, #tpu.memory_space<vmem>>, vector<8x32xf32>
      tpu.vector_store %arg8[%c0_10, %c0_11], %11 {strides = array<i32>} : memref<8x32xf32, #tpu.memory_space<vmem>>, vector<8x32xf32>,
    } else {
    }
    %c0 = arith.constant 0 : index
    %c0_1 = arith.constant 0 : index
    %3 = vector.load %arg8[%c0, %c0_1] : memref<8x32xf32, #tpu.memory_space<vmem>>, vector<8x32xf32>
    %c0_2 = arith.constant 0 : index
    %c0_3 = arith.constant 0 : index
    %c0_4 = arith.constant 0 : index
    %4 = vector.load %arg3[%c0_2, %c0_3, %c0_4] : memref<8x8x32xf32, #tpu.memory_space<vmem>>, vector<8x8x32xf32>
    %cst = arith.constant dense<0.000000e+00> : vector<8x32xf32>
    %5 = vector.multi_reduction <add>, %4, %cst [1] : vector<8x8x32xf32> to vector<8x32xf32>
    %6 = arith.addf %3, %5 : vector<8x32xf32>
    %c0_5 = arith.constant 0 : index
    %c0_6 = arith.constant 0 : index
    %7 = vector.load %arg8[%c0_5, %c0_6] : memref<8x32xf32, #tpu.memory_space<vmem>>, vector<8x32xf32>
    tpu.vector_store %arg8[%c0_5, %c0_6], %6 {strides = array<i32>} : memref<8x32xf32, #tpu.memory_space<vmem>>, vector<8x32xf32>,
    %c0_i32_7 = arith.constant 0 : i32
    %8 = arith.cmpi eq, %arg1, %c0_i32_7 : i32
    %9 = arith.extui %8 : i1 to i32
    %c0_i32_8 = arith.constant 0 : i32
    %10 = arith.cmpi ne, %9, %c0_i32_8 : i32
    scf.if %10 {
      %c0_9 = arith.constant 0 : index
      %c0_10 = arith.constant 0 : index
      %11 = vector.load %arg2[%c0_9, %c0_10] : memref<8x32xf32, #tpu.memory_space<vmem>>, vector<8x32xf32>
      %c0_11 = arith.constant 0 : index
      %c0_12 = arith.constant 0 : index
      %12 = vector.load %arg8[%c0_11, %c0_12] : memref<8x32xf32, #tpu.memory_space<vmem>>, vector<8x32xf32>
      %cst_13 = arith.constant 1.250000e-01 : f32
      %13 = vector.broadcast %cst_13 : f32 to vector<8x32xf32>
      %14 = arith.mulf %12, %13 : vector<8x32xf32>
      %cst_14 = arith.constant dense<0.000000e+00> : vector<8xf32>
      %15 = vector.multi_reduction <add>, %11, %cst_14 [1] : vector<8x32xf32> to vector<8xf32>
      %16 = vector.shape_cast %15 : vector<8xf32> to vector<8x1xf32>
      %cst_15 = arith.constant dense<0.000000e+00> : vector<8xf32>
      %17 = vector.multi_reduction <add>, %14, %cst_15 [1] : vector<8x32xf32> to vector<8xf32>
      %18 = vector.shape_cast %17 : vector<8xf32> to vector<8x1xf32>
      %19 = arith.addf %16, %18 : vector<8x1xf32>
      %cst_16 = arith.constant 1.562500e-02 : f32
      %20 = vector.broadcast %cst_16 : f32 to vector<8x1xf32>
      %21 = arith.mulf %19, %20 : vector<8x1xf32>
      %22 = vector.broadcast %21 : vector<8x1xf32> to vector<8x32xf32>
      %23 = arith.subf %11, %22 : vector<8x32xf32>
      %24 = vector.broadcast %21 : vector<8x1xf32> to vector<8x32xf32>
      %25 = arith.subf %14, %24 : vector<8x32xf32>
      %26 = arith.mulf %23, %23 : vector<8x32xf32>
      %cst_17 = arith.constant dense<0.000000e+00> : vector<8xf32>
      %27 = vector.multi_reduction <add>, %26, %cst_17 [1] : vector<8x32xf32> to vector<8xf32>
      %28 = vector.shape_cast %27 : vector<8xf32> to vector<8x1xf32>
      %29 = arith.mulf %25, %25 : vector<8x32xf32>
      %cst_18 = arith.constant dense<0.000000e+00> : vector<8xf32>
      %30 = vector.multi_reduction <add>, %29, %cst_18 [1] : vector<8x32xf32> to vector<8xf32>
      %31 = vector.shape_cast %30 : vector<8xf32> to vector<8x1xf32>
      %32 = arith.addf %28, %31 : vector<8x1xf32>
      %cst_19 = arith.constant 1.562500e-02 : f32
      %33 = vector.broadcast %cst_19 : f32 to vector<8x1xf32>
      %34 = arith.mulf %32, %33 : vector<8x1xf32>
      %cst_20 = arith.constant 9.99999974E-6 : f32
      %35 = vector.broadcast %cst_20 : f32 to vector<8x1xf32>
      %36 = arith.addf %34, %35 : vector<8x1xf32>
      %37 = math.rsqrt %36 : vector<8x1xf32>
      %38 = vector.broadcast %37 : vector<8x1xf32> to vector<8x32xf32>
      %39 = arith.mulf %23, %38 : vector<8x32xf32>
      %c0_21 = arith.constant 0 : index
      %c0_22 = arith.constant 0 : index
      %40 = vector.load %arg4[%c0_21, %c0_22] : memref<32x128xf32, #tpu.memory_space<vmem>>, vector<32x128xf32>
      %cst_23 = arith.constant dense<0.000000e+00> : vector<8x128xf32>
      %41 = tpu.matmul %39, %40, %cst_23 {dimension_numbers = #tpu.dot_dimension_numbers<[1], [0], [0], [1], [0, 0, 1, 1], [], []>} : vector<8x32xf32>, vector<32x128xf32>, vector<8x128xf32> -> vector<8x128xf32>
      %42 = vector.broadcast %37 : vector<8x1xf32> to vector<8x32xf32>
      %43 = arith.mulf %25, %42 : vector<8x32xf32>
      %c0_24 = arith.constant 0 : index
      %c0_25 = arith.constant 0 : index
      %44 = vector.load %arg5[%c0_24, %c0_25] : memref<32x128xf32, #tpu.memory_space<vmem>>, vector<32x128xf32>
      %cst_26 = arith.constant dense<0.000000e+00> : vector<8x128xf32>
      %45 = tpu.matmul %43, %44, %cst_26 {dimension_numbers = #tpu.dot_dimension_numbers<[1], [0], [0], [1], [0, 0, 1, 1], [], []>} : vector<8x32xf32>, vector<32x128xf32>, vector<8x128xf32> -> vector<8x128xf32>
      %46 = arith.addf %41, %45 : vector<8x128xf32>
      %c0_27 = arith.constant 0 : index
      %c0_28 = arith.constant 0 : index
      %47 = vector.load %arg6[%c0_27, %c0_28] : memref<1x128xf32, #tpu.memory_space<vmem>>, vector<1x128xf32>
      %48 = vector.broadcast %47 : vector<1x128xf32> to vector<8x128xf32>
      %49 = arith.addf %46, %48 : vector<8x128xf32>
      %c0_29 = arith.constant 0 : index
      %c0_30 = arith.constant 0 : index
      %50 = vector.load %arg7[%c0_29, %c0_30] : memref<8x128xf32, #tpu.memory_space<vmem>>, vector<8x128xf32>
      tpu.vector_store %arg7[%c0_29, %c0_30], %49 {strides = array<i32>} : memref<8x128xf32, #tpu.memory_space<vmem>>, vector<8x128xf32>,
    } else {
    }
    return
  }
  func.func @transform_0(%arg0: i32, %arg1: i32) -> (i32, i32) {
    %c0_i32 = arith.constant 0 : i32
    %c0_i32_0 = arith.constant 0 : i32
    return %arg0, %c0_i32 : i32, i32
  }
  func.func @transform_1(%arg0: i32, %arg1: i32) -> (i32, i32, i32) {
    %c0_i32 = arith.constant 0 : i32
    %c0_i32_0 = arith.constant 0 : i32
    return %arg0, %arg1, %c0_i32 : i32, i32, i32
  }
  func.func @transform_2(%arg0: i32, %arg1: i32) -> (i32, i32) {
    %c0_i32 = arith.constant 0 : i32
    %c0_i32_0 = arith.constant 0 : i32
    %c0_i32_1 = arith.constant 0 : i32
    return %c0_i32, %c0_i32_0 : i32, i32
  }
  func.func @transform_3(%arg0: i32, %arg1: i32) -> (i32, i32) {
    %c0_i32 = arith.constant 0 : i32
    %c0_i32_0 = arith.constant 0 : i32
    %c0_i32_1 = arith.constant 0 : i32
    return %c0_i32, %c0_i32_0 : i32, i32
  }
  func.func @transform_4(%arg0: i32, %arg1: i32) -> (i32, i32) {
    %c0_i32 = arith.constant 0 : i32
    %c0_i32_0 = arith.constant 0 : i32
    %c0_i32_1 = arith.constant 0 : i32
    return %c0_i32, %c0_i32_0 : i32, i32
  }
  func.func @transform_5(%arg0: i32, %arg1: i32) -> (i32, i32) {
    %c0_i32 = arith.constant 0 : i32
    %c0_i32_0 = arith.constant 0 : i32
    return %arg0, %c0_i32 : i32, i32
  }
}

</mosaic_0001>

<llo_original>
// kernel: tpu_custom_call.1
$region0: #{tpu_custom_call.1}
  #allocation0 [shape = 'u32[]', space=smem, size = 0x4, offset = 0x4, fixed_abs, tag = 'smem constant byte address 0x4 - core index']
  #allocation1 [shape = 'u32[144,128]{1,0:T(1,128)}', space=vmem, size = 0x12000, scoped, tag = 'internal scratch']
  #allocation2 [shape = 'f32[8,32]{1,0:T(8,128)}', space=vmem, size = 0x1000, scoped, tag = 'scratch operand']
  %s0 = inlined_call_operand.hbm [shape: f32[8,32], index: 0, kind: input, shape index: {}]
  %s1 = inlined_call_operand.hbm [shape: f32[8,8,32], index: 1, kind: input, shape index: {}]
  %s2 = inlined_call_operand.hbm [shape: f32[32,128], index: 2, kind: input, shape index: {}]
  %s3 = inlined_call_operand.hbm [shape: f32[32,128], index: 3, kind: input, shape index: {}]
  %s4 = inlined_call_operand.vmem [shape: f32[1,128], index: 4, kind: input, shape index: {}]
  %s5 = inlined_call_operand.hbm [shape: f32[8,128], index: 5, kind: output, shape index: {}]
  %s6 = sld [smem:[#allocation0]]
  $region54: #{tpu_custom_call.1} parent=0
    _
  %s8 = ssub.s32 1, %s6
  %s9 = scalar_select 0, %s8, %s6
  $region1: #{tpu_custom_call.1} parent=0
    #allocation3 [shape = 'u8[4096]{0}', space=vmem, size = 0x1000, scoped, tag = 'input window, operand 0, single buffered']
    #allocation4 [shape = 's32[1]{0}', space=sflag, size = 0x4, scoped, tag = 'scoped memory for tpu_custom_call.1']
    #allocation5 [shape = 's32[1]{0}', space=sflag, size = 0x4, scoped, tag = 'scoped memory for tpu_custom_call.1']
    #allocation6 [shape = 'u8[32768]{0}', space=vmem, size = 0x8000, scoped, tag = 'input window, operand 1, single buffered']
    #allocation7 [shape = 's32[1]{0}', space=sflag, size = 0x4, scoped, tag = 'scoped memory for tpu_custom_call.1']
    #allocation8 [shape = 'u8[16384]{0}', space=vmem, size = 0x4000, scoped, tag = 'input window, operand 2, single buffered']
    #allocation9 [shape = 'u8[16384]{0}', space=vmem, size = 0x4000, scoped, tag = 'input window, operand 3, single buffered']
    #allocation10 [shape = 's32[1]{0}', space=sflag, size = 0x4, scoped, tag = 'scoped memory for tpu_custom_call.1']
    #allocation11 [shape = 'u8[4096]{0}', space=vmem, size = 0x1000, scoped, tag = 'output window, operand 0, single buffered']
    %10 = vsyncpa [#allocation4], 0
    %11 = vsyncpa [#allocation7], 0
    %12 = vsyncpa [#allocation10], 0
    %13 = vsyncpa [#allocation5], 0
    // Predicated region
    $region2: #{tpu_custom_call.1} parent=1 // pred_check
      _
    $region3: #{tpu_custom_call.1} parent=1 // pred_check_branch
      %15 = sbr.rel (0) target = $region5
    $region4: #{tpu_custom_call.1} parent=1 // pred_region
      %s17 = ssub.s32 128, 128
      %18 = vsyncadd [#allocation4], %s17
      %s20 = sshll.u32 [#allocation3], 4
      %s21 = int_to_ptr.vmem [resolvable:$true] %s20
      %23 = dma.hbm_to_vmem [thread:$0]  %s0, 128, %s21, [#allocation4]
    $region5: #{tpu_custom_call.1} parent=1 // pred_fallthru
      _
    // Predicated region
    $region6: #{tpu_custom_call.1} parent=1 // pred_check
      _
    $region7: #{tpu_custom_call.1} parent=1 // pred_check_branch
      %25 = sbr.rel (0) target = $region9
    $region8: #{tpu_custom_call.1} parent=1 // pred_region
      %s27 = ssub.s32 1024, 1024
      %28 = vsyncadd [#allocation7], %s27
      %s29 = sshll.u32 [#allocation6], 4
      %s30 = int_to_ptr.vmem [resolvable:$true] %s29
      %35 = dma.hbm_to_vmem [thread:$0]  %s1, 1024, %s30, [#allocation7], 128, 128, 8
    $region9: #{tpu_custom_call.1} parent=1 // pred_fallthru
      _
    // Predicated region
    $region10: #{tpu_custom_call.1} parent=1 // pred_check
      _
    $region11: #{tpu_custom_call.1} parent=1 // pred_check_branch
      %37 = sbr.rel (0) target = $region13
    $region12: #{tpu_custom_call.1} parent=1 // pred_region
      %s39 = ssub.s32 512, 512
      %40 = vsyncadd [#allocation7], %s39
      %s41 = sshll.u32 [#allocation8], 4
      %s42 = int_to_ptr.vmem [resolvable:$true] %s41
      %47 = dma.hbm_to_vmem [thread:$0]  %s2, 512, %s42, [#allocation7], 128, 128, 8
    $region13: #{tpu_custom_call.1} parent=1 // pred_fallthru
      _
    // Predicated region
    $region14: #{tpu_custom_call.1} parent=1 // pred_check
      _
    $region15: #{tpu_custom_call.1} parent=1 // pred_check_branch
      %49 = sbr.rel (0) target = $region17
    $region16: #{tpu_custom_call.1} parent=1 // pred_region
      %s51 = ssub.s32 512, 512
      %52 = vsyncadd [#allocation10], %s51
      %s53 = sshll.u32 [#allocation9], 4
      %s54 = int_to_ptr.vmem [resolvable:$true] %s53
      %59 = dma.hbm_to_vmem [thread:$0]  %s3, 512, %s54, [#allocation10], 128, 128, 8
    $region17: #{tpu_custom_call.1} parent=1 // pred_fallthru
      _
    // Predicated region
    $region18: #{tpu_custom_call.1} parent=1 // pred_check
      _
    $region19: #{tpu_custom_call.1} parent=1 // pred_check_branch
      %61 = sbr.rel (0) target = $region21
    $region20: #{tpu_custom_call.1} parent=1 // pred_region
      _
    $region21: #{tpu_custom_call.1} parent=1 // pred_fallthru
      _
    // Predicated region
    $region22: #{tpu_custom_call.1} parent=1 // pred_check
      _
    $region23: #{tpu_custom_call.1} parent=1 // pred_check_branch
      %63 = sbr.rel (0) target = $region25
    $region24: #{tpu_custom_call.1} parent=1 // pred_region
      %64 = dma.done [#allocation4], 128
    $region25: #{tpu_custom_call.1} parent=1 // pred_fallthru
      _
    // Predicated region
    $region26: #{tpu_custom_call.1} parent=1 // pred_check
      _
    $region27: #{tpu_custom_call.1} parent=1 // pred_check_branch
      %66 = sbr.rel (0) target = $region29
    $region28: #{tpu_custom_call.1} parent=1 // pred_region
      %67 = dma.done [#allocation7], 1024
    $region29: #{tpu_custom_call.1} parent=1 // pred_fallthru
      _
    // Predicated region
    $region30: #{tpu_custom_call.1} parent=1 // pred_check
      _
    $region31: #{tpu_custom_call.1} parent=1 // pred_check_branch
      %69 = sbr.rel (0) target = $region33
    $region32: #{tpu_custom_call.1} parent=1 // pred_region
      %70 = dma.done [#allocation7], 512
    $region33: #{tpu_custom_call.1} parent=1 // pred_fallthru
      _
    // Predicated region
    $region34: #{tpu_custom_call.1} parent=1 // pred_check
      _
    $region35: #{tpu_custom_call.1} parent=1 // pred_check_branch
      %72 = sbr.rel (0) target = $region37
    $region36: #{tpu_custom_call.1} parent=1 // pred_region
      %73 = dma.done [#allocation10], 512
    $region37: #{tpu_custom_call.1} parent=1 // pred_fallthru
      _
    %p74 = scmp.eq.s32.totalorder 0, 0
    // Predicated region
    $region38: #{tpu_custom_call.1} parent=1 // pred_check
      %p75 = pneg %p74
    $region39: #{tpu_custom_call.1} parent=1 // pred_check_branch
      %77 = sbr.rel (%p75) target = $region41
    $region40: #{tpu_custom_call.1} parent=1 // pred_region
      %vm78 = vcmask 261120
      %79 = vst.msk [vmem:[#allocation2] sm:$0xff] %vm78, 0.0
    $region41: #{tpu_custom_call.1} parent=1 // pred_fallthru
      _
    %v80 = vld [vmem:[#allocation2] sm:$0xff]
    %v81 = vld [vmem:[#allocation6] sm:$0xff]
    %v82 = vld [vmem:[#allocation6 + $0x8] sm:$0xff]
    %v83 = vld [vmem:[#allocation6 + $0x10] sm:$0xff]
    %v84 = vld [vmem:[#allocation6 + $0x18] sm:$0xff]
    %v85 = vld [vmem:[#allocation6 + $0x20] sm:$0xff]
    %v86 = vld [vmem:[#allocation6 + $0x28] sm:$0xff]
    %v87 = vld [vmem:[#allocation6 + $0x30] sm:$0xff]
    %v88 = vld [vmem:[#allocation6 + $0x38] sm:$0xff]
    %vm89 = vcmask 261120
    %v90 = vsel %vm89, %v81, 0.0
    %v91 = vrot.slane %v90, 4
    %v92 = vadd.f32 %v90, %v91
    %v93 = vrot.slane %v92, 2
    %v94 = vadd.f32 %v92, %v93
    %v95 = vrot.slane %v94, 1
    %v96 = vadd.f32 %v94, %v95
    %v97 = vsel %vm89, %v82, 0.0
    %v98 = vrot.slane %v97, 4
    %v99 = vadd.f32 %v97, %v98
    %v100 = vrot.slane %v99, 2
    %v101 = vadd.f32 %v99, %v100
    %v102 = vrot.slane %v101, 1
    %v103 = vadd.f32 %v101, %v102
    %v104 = vsel %vm89, %v83, 0.0
    %v105 = vrot.slane %v104, 4
    %v106 = vadd.f32 %v104, %v105
    %v107 = vrot.slane %v106, 2
    %v108 = vadd.f32 %v106, %v107
    %v109 = vrot.slane %v108, 1
    %v110 = vadd.f32 %v108, %v109
    %v111 = vsel %vm89, %v84, 0.0
    %v112 = vrot.slane %v111, 4
    %v113 = vadd.f32 %v111, %v112
    %v114 = vrot.slane %v113, 2
    %v115 = vadd.f32 %v113, %v114
    %v116 = vrot.slane %v115, 1
    %v117 = vadd.f32 %v115, %v116
    %v118 = vsel %vm89, %v85, 0.0
    %v119 = vrot.slane %v118, 4
    %v120 = vadd.f32 %v118, %v119
    %v121 = vrot.slane %v120, 2
    %v122 = vadd.f32 %v120, %v121
    %v123 = vrot.slane %v122, 1
    %v124 = vadd.f32 %v122, %v123
    %v125 = vsel %vm89, %v86, 0.0
    %v126 = vrot.slane %v125, 4
    %v127 = vadd.f32 %v125, %v126
    %v128 = vrot.slane %v127, 2
    %v129 = vadd.f32 %v127, %v128
    %v130 = vrot.slane %v129, 1
    %v131 = vadd.f32 %v129, %v130
    %v132 = vsel %vm89, %v87, 0.0
    %v133 = vrot.slane %v132, 4
    %v134 = vadd.f32 %v132, %v133
    %v135 = vrot.slane %v134, 2
    %v136 = vadd.f32 %v134, %v135
    %v137 = vrot.slane %v136, 1
    %v138 = vadd.f32 %v136, %v137
    %v139 = vsel %vm89, %v88, 0.0
    %v140 = vrot.slane %v139, 4
    %v141 = vadd.f32 %v139, %v140
    %v142 = vrot.slane %v141, 2
    %v143 = vadd.f32 %v141, %v142
    %v144 = vrot.slane %v143, 1
    %v145 = vadd.f32 %v143, %v144
    %vm154 = vcmask 1041409
    %v155 = vsel %vm154, %v103, %v96
    %vm156 = vcmask 1042434
    %v157 = vsel %vm156, %v110, %v155
    %vm158 = vcmask 1043459
    %v159 = vsel %vm158, %v117, %v157
    %vm160 = vcmask 1044484
    %v161 = vsel %vm160, %v124, %v159
    %vm162 = vcmask 1045509
    %v163 = vsel %vm162, %v131, %v161
    %vm164 = vcmask 1046534
    %v165 = vsel %vm164, %v138, %v163
    %vm166 = vcmask 1047559
    %v167 = vsel %vm166, %v145, %v165
    %v169 = vadd.f32 %v80, %v167
    %170 = vst.msk [vmem:[#allocation2] sm:$0xff] %vm89, %v169
    // Predicated region
    $region42: #{tpu_custom_call.1} parent=1 // pred_check
      %p171 = pneg %p74
    $region43: #{tpu_custom_call.1} parent=1 // pred_check_branch
      %173 = sbr.rel (%p171) target = $region45
    $region44: #{tpu_custom_call.1} parent=1 // pred_region
      %v174 = vld [vmem:[#allocation3] sm:$0xff]
      %v175 = vld [vmem:[#allocation2] sm:$0xff]
      %v176 = vmul.f32 %v175, 0.125
      %v177 = vsel %vm89, %v174, 0.0
      %178 = vadd.xlane.f32.xlu0 %v177
      %v179 = vpop.xlane.xlu0 %178
      %v180 = vsel %vm89, %v176, 0.0
      %181 = vadd.xlane.f32.xlu0 %v180
      %v182 = vpop.xlane.xlu0 %181
      %v183 = vadd.f32 %v179, %v182
      %v184 = vmul.f32 %v183, 0.015625
      %v185 = vsub.f32 %v174, %v184
      %v186 = vsub.f32 %v176, %v184
      %v187 = vmul.f32 %v185, %v185
      %v188 = vsel %vm89, %v187, 0.0
      %189 = vadd.xlane.f32.xlu0 %v188
      %v190 = vpop.xlane.xlu0 %189
      %v191 = vmul.f32 %v186, %v186
      %v192 = vsel %vm89, %v191, 0.0
      %193 = vadd.xlane.f32.xlu0 %v192
      %v194 = vpop.xlane.xlu0 %193
      %v195 = vadd.f32 %v190, %v194
      %v196 = vmul.f32 %v195, 0.015625
      %v197 = vadd.f32 %v196, 1e-05
      %v198 = vrsqrt.pop %v197
      %v199 = vmul.f32 %v185, %v198
      %v200 = vld [vmem:[#allocation8] sm:$0xff]
      %v201 = vld [vmem:[#allocation8 + $0x8] sm:$0xff]
      %v202 = vld [vmem:[#allocation8 + $0x10] sm:$0xff]
      %v203 = vld [vmem:[#allocation8 + $0x18] sm:$0xff]
      %v204 = vmul.f32 %v186, %v198
      %v205 = vld [vmem:[#allocation9] sm:$0xff]
      %v206 = vld [vmem:[#allocation9 + $0x8] sm:$0xff]
      %v207 = vld [vmem:[#allocation9 + $0x10] sm:$0xff]
      %v208 = vld [vmem:[#allocation9 + $0x18] sm:$0xff]
      %v210 = vsel %vm89, %v204, 0
      %212 = vmatprep.subr.mxu0 0.0
      %213 = vmatpush1.msra.mxu0 %v205
      %214 = vmatprep.subr.mxu0 0.0
      %215 = vmatpush1.msra.mxu0 %v206
      %216 = vmatprep.subr.mxu0 0.0
      %217 = vmatpush1.msra.mxu0 %v207
      %218 = vmatprep.subr.mxu0 0.0
      %219 = vmatpush1.msra.mxu0 %v208
      %220 = vmatprep.subr.mxu0 0.0
      %221 = vmatpush1.msra.mxu0 0.0
      %222 = vmatprep.subr.mxu0 0.0
      %223 = vmatpush1.msra.mxu0 0.0
      %224 = vmatprep.subr.mxu0 0.0
      %225 = vmatpush1.msra.mxu0 0.0
      %226 = vmatprep.subr.mxu0 0.0
      %227 = vmatpush1.msra.mxu0 0.0
      %228 = vmatprep.subr.mxu0 0.0
      %229 = vmatpush1.msra.mxu0 0.0
      %230 = vmatprep.subr.mxu0 0.0
      %231 = vmatpush1.msra.mxu0 0.0
      %232 = vmatprep.subr.mxu0 0.0
      %233 = vmatpush1.msra.mxu0 0.0
      %234 = vmatprep.subr.mxu0 0.0
      %235 = vmatpush1.msra.mxu0 0.0
      %236 = vmatprep.subr.mxu0 0.0
      %237 = vmatpush1.msra.mxu0 0.0
      %238 = vmatprep.subr.mxu0 0.0
      %239 = vmatpush1.msra.mxu0 0.0
      %240 = vmatprep.subr.mxu0 0.0
      %241 = vmatpush1.msra.mxu0 0.0
      %242 = vmatprep.subr.mxu0 0.0
      %243 = vmatpush1.msra.mxu0 0.0
      %244 = vmatprep.subr.mxu0 0.0
      %245 = vmatpush1.msra.mxu0 0.0
      %246 = vmatprep.subr.mxu0 0.0
      %247 = vmatpush1.msra.mxu0 0.0
      %248 = vmatprep.subr.mxu0 0.0
      %249 = vmatpush1.msra.mxu0 0.0
      %250 = vmatprep.subr.mxu0 0.0
      %251 = vmatpush1.msra.mxu0 0.0
      %252 = vmatprep.subr.mxu0 0.0
      %253 = vmatpush1.msra.mxu0 0.0
      %254 = vmatprep.subr.mxu0 0.0
      %255 = vmatpush1.msra.mxu0 0.0
      %256 = vmatprep.subr.mxu0 0.0
      %257 = vmatpush1.msra.mxu0 0.0
      %258 = vmatprep.subr.mxu0 0.0
      %259 = vmatpush1.msra.mxu0 0.0
      %260 = vmatprep.subr.mxu0 0.0
      %261 = vmatpush1.msra.mxu0 0.0
      %262 = vmatprep.subr.mxu0 0.0
      %263 = vmatpush1.msra.mxu0 0.0
      %264 = vmatprep.subr.mxu0 0.0
      %265 = vmatpush1.msra.mxu0 0.0
      %266 = vmatprep.subr.mxu0 0.0
      %267 = vmatpush1.msra.mxu0 0.0
      %268 = vmatprep.subr.mxu0 0.0
      %269 = vmatpush1.msra.mxu0 0.0
      %270 = vmatprep.subr.mxu0 0.0
      %271 = vmatpush1.msra.mxu0 0.0
      %272 = vmatprep.subr.mxu0 0.0
      %273 = vmatpush1.msra.mxu0 0.0
      %274 = vmatprep.subr.mxu0 0.0
      %275 = vmatpush1.msra.mxu0 0.0
      %276 = vmatprep.mubr.f32.mxu0 0.0
      %277 = vmatmul.mubr.f32.gmra.mrb[0].mxu0 %v210
      %v278 = vpop.f32.mrb[0].mxu0
      %v279 = vadd.f32 0.0, %v278
      %v280 = vpop.f32.mrb[0].mxu0
      %281 = vdwg.mxu0
      %v283 = vsel %vm89, %v199, 0
      %285 = vmatprep.subr.mxu0 0.0
      %286 = vmatpush1.msra.mxu0 %v200
      %287 = vmatprep.subr.mxu0 0.0
      %288 = vmatpush1.msra.mxu0 %v201
      %289 = vmatprep.subr.mxu0 0.0
      %290 = vmatpush1.msra.mxu0 %v202
      %291 = vmatprep.subr.mxu0 0.0
      %292 = vmatpush1.msra.mxu0 %v203
      %293 = vmatprep.subr.mxu0 0.0
      %294 = vmatpush1.msra.mxu0 0.0
      %295 = vmatprep.subr.mxu0 0.0
      %296 = vmatpush1.msra.mxu0 0.0
      %297 = vmatprep.subr.mxu0 0.0
      %298 = vmatpush1.msra.mxu0 0.0
      %299 = vmatprep.subr.mxu0 0.0
      %300 = vmatpush1.msra.mxu0 0.0
      %301 = vmatprep.subr.mxu0 0.0
      %302 = vmatpush1.msra.mxu0 0.0
      %303 = vmatprep.subr.mxu0 0.0
      %304 = vmatpush1.msra.mxu0 0.0
      %305 = vmatprep.subr.mxu0 0.0
      %306 = vmatpush1.msra.mxu0 0.0
      %307 = vmatprep.subr.mxu0 0.0
      %308 = vmatpush1.msra.mxu0 0.0
      %309 = vmatprep.subr.mxu0 0.0
      %310 = vmatpush1.msra.mxu0 0.0
      %311 = vmatprep.subr.mxu0 0.0
      %312 = vmatpush1.msra.mxu0 0.0
      %313 = vmatprep.subr.mxu0 0.0
      %314 = vmatpush1.msra.mxu0 0.0
      %315 = vmatprep.subr.mxu0 0.0
      %316 = vmatpush1.msra.mxu0 0.0
      %317 = vmatprep.subr.mxu0 0.0
      %318 = vmatpush1.msra.mxu0 0.0
      %319 = vmatprep.subr.mxu0 0.0
      %320 = vmatpush1.msra.mxu0 0.0
      %321 = vmatprep.subr.mxu0 0.0
      %322 = vmatpush1.msra.mxu0 0.0
      %323 = vmatprep.subr.mxu0 0.0
      %324 = vmatpush1.msra.mxu0 0.0
      %325 = vmatprep.subr.mxu0 0.0
      %326 = vmatpush1.msra.mxu0 0.0
      %327 = vmatprep.subr.mxu0 0.0
      %328 = vmatpush1.msra.mxu0 0.0
      %329 = vmatprep.subr.mxu0 0.0
      %330 = vmatpush1.msra.mxu0 0.0
      %331 = vmatprep.subr.mxu0 0.0
      %332 = vmatpush1.msra.mxu0 0.0
      %333 = vmatprep.subr.mxu0 0.0
      %334 = vmatpush1.msra.mxu0 0.0
      %335 = vmatprep.subr.mxu0 0.0
      %336 = vmatpush1.msra.mxu0 0.0
      %337 = vmatprep.subr.mxu0 0.0
      %338 = vmatpush1.msra.mxu0 0.0
      %339 = vmatprep.subr.mxu0 0.0
      %340 = vmatpush1.msra.mxu0 0.0
      %341 = vmatprep.subr.mxu0 0.0
      %342 = vmatpush1.msra.mxu0 0.0
      %343 = vmatprep.subr.mxu0 0.0
      %344 = vmatpush1.msra.mxu0 0.0
      %345 = vmatprep.subr.mxu0 0.0
      %346 = vmatpush1.msra.mxu0 0.0
      %347 = vmatprep.subr.mxu0 0.0
      %348 = vmatpush1.msra.mxu0 0.0
      %349 = vmatprep.mubr.f32.mxu0 0.0
      %350 = vmatmul.mubr.f32.gmra.mrb[0].mxu0 %v283
      %v351 = vpop.f32.mrb[0].mxu0
      %v352 = vadd.f32 %v279, %v351
      %v353 = vpop.f32.mrb[0].mxu0
      %354 = vdwg.mxu0
      %v355 = vld [vmem:[%s4] sm:$0x1]
      %v357 = vlaneseq
      %v358 = vshrl.u32 %v357, 7
      %v359 = vsub.s32 0, %v358
      %v360 = vrot.slane %v355, %v359
      %v362 = vadd.f32 %v352, %v360
      %363 = vst [vmem:[#allocation11] sm:$0xff] %v362
    $region45: #{tpu_custom_call.1} parent=1 // pred_fallthru
      _
    // Predicated region
    $region46: #{tpu_custom_call.1} parent=1 // pred_check
      _
    $region47: #{tpu_custom_call.1} parent=1 // pred_check_branch
      %365 = sbr.rel (0) target = $region49
    $region48: #{tpu_custom_call.1} parent=1 // pred_region
      %s367 = ssub.s32 128, 128
      %368 = vsyncadd [#allocation5], %s367
      %s370 = sshll.u32 [#allocation11], 4
      %s371 = int_to_ptr.vmem [resolvable:$true] %s370
      %373 = dma.vmem_to_hbm [thread:$0]  %s371, 128, %s5, [#allocation5]
    $region49: #{tpu_custom_call.1} parent=1 // pred_fallthru
      _
    // Predicated region
    $region50: #{tpu_custom_call.1} parent=1 // pred_check
      _
    $region51: #{tpu_custom_call.1} parent=1 // pred_check_branch
      %375 = sbr.rel (0) target = $region53
    $region52: #{tpu_custom_call.1} parent=1 // pred_region
      %376 = dma.done [#allocation5], 128
    $region53: #{tpu_custom_call.1} parent=1 // pred_fallthru
      _
    %377 = vsyncpa [#allocation4], 1
    %378 = vsyncpa [#allocation7], 1
    %379 = vsyncpa [#allocation10], 1
    %380 = vsyncpa [#allocation5], 1

</llo_original>
